<compile_context>
chip_gen: v7x
topology: tpu7x:2x2x1
jax: 0.10.0
libtpu: 0.0.40
codegen_flags: <defaults>
</compile_context>

<pallas_src>
import jax
import jax.numpy as jnp
from jax.experimental import pallas as pl
from jax.experimental.pallas import tpu as pltpu


def make_decoder_kernel(H: int, W: int):
    """Builds a kernel specialized to the (H, W) image-embedding shape."""

    def decoder_kernel(x_ref, w1_ref, b1_ref, w2_ref, b2_ref, out_ref):
        # x_ref  : (TB, D)      float32   batch tile
        # w1_ref : (D, Dh)      float32   (Dh = D // 14), VMEM-resident
        # b1_ref : (1, Dh)      float32
        # w2_ref : (Dh, H*W)    float32
        # b2_ref : (1, H*W)     float32
        # out_ref: (TB, H*W)    float32   softmax applied per W-wide chunk
        x = x_ref[...]

        # Linear 1 + tanh: MXU matmul (K = D fills the contraction), EUP tanh.
        h = jnp.tanh(
            jnp.dot(x, w1_ref[...], preferred_element_type=jnp.float32)
            + b1_ref[...]
        )

        # Linear 2 -> logits of shape (TB, H*W).
        # K = Dh (= 8) cannot fill the MXU; accepted — it overlaps behind the
        # first matmul / elementwise work for large TB.
        logits = (
            jnp.dot(h, w2_ref[...], preferred_element_type=jnp.float32)
            + b2_ref[...]
        )

        # Numerically-stable softmax over each contiguous W-wide chunk (the
        # last axis of the unflattened (TB, H, W) view).  Per-chunk stats use
        # static 16-lane *loads* only; the normalized chunks are concatenated
        # and written back with a single lane-dense store of the whole
        # (TB, H*W) slab (no masked per-chunk partial stores).  Normalization
        # is an exact divide so rows sum to 1 within f32 rounding.
        pieces = []
        for hh in range(H):
            chunk = logits[:, hh * W:(hh + 1) * W]
            m = jnp.max(chunk, axis=-1, keepdims=True)
            e = jnp.exp(chunk - m)
            s = jnp.sum(e, axis=-1, keepdims=True)
            pieces.append(e / s)
        out_ref[...] = jnp.concatenate(pieces, axis=-1)

    return decoder_kernel


def bravo_decoder_forward(x, w1, b1, w2, b2, image_embedding_shape,
                          *, block_b: int = 512):
    """x: (B, D) float32 -> (B, H, W) float32 (rows along W sum to 1)."""
    B, D = x.shape
    H, W = image_embedding_shape
    HW = H * W
    Dh = w1.shape[1]
    assert w1.shape == (D, Dh) and b1.shape == (1, Dh)
    assert w2.shape == (Dh, HW) and b2.shape == (1, HW)
    assert block_b % 8 == 0

    # Batch tile: the whole batch if it is small, otherwise block_b rows.
    if B <= block_b:
        TB = B                    # block == full array dim -> always legal
    else:
        TB = block_b              # multiple of 8 by construction
    num_blocks = pl.cdiv(B, TB)
    Bp = num_blocks * TB
    if Bp != B:
        # Pad with zero rows so every grid block is fully in-bounds; padded
        # rows produce a harmless (finite) softmax and are sliced off below.
        x = jnp.pad(x, ((0, Bp - B), (0, 0)))

    kernel = make_decoder_kernel(H, W)

    out_flat = pl.pallas_call(
        kernel,
        out_shape=jax.ShapeDtypeStruct((Bp, HW), jnp.float32),
        grid=(num_blocks,),
        in_specs=[
            pl.BlockSpec((TB, D), lambda i: (i, 0)),    # batch-tiled activations
            pl.BlockSpec((D, Dh), lambda i: (0, 0)),    # weights: VMEM-resident
            pl.BlockSpec((1, Dh), lambda i: (0, 0)),
            pl.BlockSpec((Dh, HW), lambda i: (0, 0)),
            pl.BlockSpec((1, HW), lambda i: (0, 0)),
        ],
        out_specs=pl.BlockSpec((TB, HW), lambda i: (i, 0)),
        compiler_params=pltpu.CompilerParams(
            # Batch steps are independent -> megacore-shardable on v7x.
            dimension_semantics=("parallel",),
        ),
    )(x, w1, b1, w2, b2)

    return out_flat[:B].reshape(B, H, W)


def reference_forward(x, w1, b1, w2, b2, image_embedding_shape):
    H, W = image_embedding_shape
    h = jnp.tanh(x @ w1 + b1)
    logits = (h @ w2 + b2).reshape(x.shape[0], H, W)
    return jax.nn.softmax(logits, axis=-1)


if __name__ == "__main__":
    # Shapes consistent with the module:
    #   input_shape = (112,) -> hidden = 112 // 14 = 8
    #   image_embedding_shape = (4, 16) -> per-sample output (4, 16)
    D = 112
    Dh = D // 14                      # 8
    image_embedding_shape = (4, 16)
    H, W = image_embedding_shape

    key = jax.random.PRNGKey(0)
    kx, k1, kb1, k2, kb2 = jax.random.split(key, 5)

    # Deterministic synthetic parameters (torch nn.Linear-like scale),
    # stored as (in, out) so the kernel computes x @ W directly.
    w1 = jax.random.uniform(k1, (D, Dh), jnp.float32, -1.0, 1.0) / jnp.sqrt(D)
    b1 = jax.random.uniform(kb1, (1, Dh), jnp.float32, -1.0, 1.0) / jnp.sqrt(D)
    w2 = jax.random.uniform(k2, (Dh, H * W), jnp.float32, -1.0, 1.0) / jnp.sqrt(Dh)
    b2 = jax.random.uniform(kb2, (1, H * W), jnp.float32, -1.0, 1.0) / jnp.sqrt(Dh)

    def check(B, block_b):
        x = jax.random.normal(jax.random.fold_in(kx, B), (B, D), dtype=jnp.float32)
        out = bravo_decoder_forward(x, w1, b1, w2, b2, image_embedding_shape,
                                    block_b=block_b)
        out = jax.block_until_ready(out)
        ref = reference_forward(x, w1, b1, w2, b2, image_embedding_shape)
        assert out.shape == (B, H, W)
        # Small tolerance for MXU f32 matmul precision differences vs XLA.
        assert jnp.allclose(out, ref, atol=2e-3, rtol=2e-3)
        # Softmax normalization is exact now -> rows sum to 1 within f32.
        assert jnp.allclose(out.sum(axis=-1), jnp.ones((B, H)), atol=1e-4)

    # Small shape consistent with the module (single block, TB == B).
    check(B=2, block_b=512)
    # Exercise the batch-tiled + padded grid path (4 blocks of 256 rows).
    check(B=1000, block_b=256)

    print("KERNEL_OK")
</pallas_src>

<mosaic_0001>
module attributes {stable_mosaic.version = 11 : i64} {
  func.func @decoder_kernel(%arg0: i32, %arg1: memref<2x112xf32, #tpu.memory_space<vmem>>, %arg2: memref<112x8xf32, #tpu.memory_space<vmem>>, %arg3: memref<1x8xf32, #tpu.memory_space<vmem>>, %arg4: memref<8x64xf32, #tpu.memory_space<vmem>>, %arg5: memref<1x64xf32, #tpu.memory_space<vmem>>, %arg6: memref<2x64xf32, #tpu.memory_space<vmem>>) attributes {dimension_semantics = [#tpu.dimension_semantics<parallel>], iteration_bounds = array<i64: 1>, scalar_prefetch = 0 : i64, scratch_operands = 0 : i64, tpu.core_type = #tpu.core_type<tc>, window_params = [{transform_indices = @transform_0, window_bounds = array<i64: 2, 112>}, {pipeline_mode = #tpu.pipeline_mode<synchronous>, transform_indices = @transform_1, window_bounds = array<i64: 112, 8>}, {pipeline_mode = #tpu.pipeline_mode<synchronous>, transform_indices = @transform_2, window_bounds = array<i64: 1, 8>}, {pipeline_mode = #tpu.pipeline_mode<synchronous>, transform_indices = @transform_3, window_bounds = array<i64: 8, 64>}, {pipeline_mode = #tpu.pipeline_mode<synchronous>, transform_indices = @transform_4, window_bounds = array<i64: 1, 64>}, {transform_indices = @transform_5, window_bounds = array<i64: 2, 64>}]} {
    %c0 = arith.constant 0 : index
    %c0_0 = arith.constant 0 : index
    %0 = vector.load %arg1[%c0, %c0_0] : memref<2x112xf32, #tpu.memory_space<vmem>>, vector<2x112xf32>
    %c0_1 = arith.constant 0 : index
    %c0_2 = arith.constant 0 : index
    %1 = vector.load %arg2[%c0_1, %c0_2] : memref<112x8xf32, #tpu.memory_space<vmem>>, vector<112x8xf32>
    %cst = arith.constant dense<0.000000e+00> : vector<2x8xf32>
    %2 = tpu.matmul %0, %1, %cst {dimension_numbers = #tpu.dot_dimension_numbers<[1], [0], [0], [1], [0, 0, 1, 1], [], []>} : vector<2x112xf32>, vector<112x8xf32>, vector<2x8xf32> -> vector<2x8xf32>
    %c0_3 = arith.constant 0 : index
    %c0_4 = arith.constant 0 : index
    %3 = vector.load %arg3[%c0_3, %c0_4] : memref<1x8xf32, #tpu.memory_space<vmem>>, vector<1x8xf32>
    %4 = vector.broadcast %3 : vector<1x8xf32> to vector<2x8xf32>
    %5 = arith.addf %2, %4 : vector<2x8xf32>
    %6 = math.tanh %5 : vector<2x8xf32>
    %c0_5 = arith.constant 0 : index
    %c0_6 = arith.constant 0 : index
    %7 = vector.load %arg4[%c0_5, %c0_6] : memref<8x64xf32, #tpu.memory_space<vmem>>, vector<8x64xf32>
    %cst_7 = arith.constant dense<0.000000e+00> : vector<2x64xf32>
    %8 = tpu.matmul %6, %7, %cst_7 {dimension_numbers = #tpu.dot_dimension_numbers<[1], [0], [0], [1], [0, 0, 1, 1], [], []>} : vector<2x8xf32>, vector<8x64xf32>, vector<2x64xf32> -> vector<2x64xf32>
    %c0_8 = arith.constant 0 : index
    %c0_9 = arith.constant 0 : index
    %9 = vector.load %arg5[%c0_8, %c0_9] : memref<1x64xf32, #tpu.memory_space<vmem>>, vector<1x64xf32>
    %10 = vector.broadcast %9 : vector<1x64xf32> to vector<2x64xf32>
    %11 = arith.addf %8, %10 : vector<2x64xf32>
    %12 = vector.extract_strided_slice %11 {offsets = [0, 0], sizes = [2, 16], strides = [1, 1]} : vector<2x64xf32> to vector<2x16xf32>
    %cst_10 = arith.constant dense<0xFF800000> : vector<2xf32>
    %13 = vector.multi_reduction <maximumf>, %12, %cst_10 [1] : vector<2x16xf32> to vector<2xf32>
    %14 = vector.shape_cast %13 : vector<2xf32> to vector<2x1xf32>
    %15 = vector.broadcast %14 : vector<2x1xf32> to vector<2x16xf32>
    %16 = arith.subf %12, %15 : vector<2x16xf32>
    %17 = math.exp %16 : vector<2x16xf32>
    %cst_11 = arith.constant dense<0.000000e+00> : vector<2xf32>
    %18 = vector.multi_reduction <add>, %17, %cst_11 [1] : vector<2x16xf32> to vector<2xf32>
    %19 = vector.shape_cast %18 : vector<2xf32> to vector<2x1xf32>
    %20 = vector.broadcast %19 : vector<2x1xf32> to vector<2x16xf32>
    %21 = arith.divf %17, %20 : vector<2x16xf32>
    %22 = vector.extract_strided_slice %11 {offsets = [0, 16], sizes = [2, 16], strides = [1, 1]} : vector<2x64xf32> to vector<2x16xf32>
    %cst_12 = arith.constant dense<0xFF800000> : vector<2xf32>
    %23 = vector.multi_reduction <maximumf>, %22, %cst_12 [1] : vector<2x16xf32> to vector<2xf32>
    %24 = vector.shape_cast %23 : vector<2xf32> to vector<2x1xf32>
    %25 = vector.broadcast %24 : vector<2x1xf32> to vector<2x16xf32>
    %26 = arith.subf %22, %25 : vector<2x16xf32>
    %27 = math.exp %26 : vector<2x16xf32>
    %cst_13 = arith.constant dense<0.000000e+00> : vector<2xf32>
    %28 = vector.multi_reduction <add>, %27, %cst_13 [1] : vector<2x16xf32> to vector<2xf32>
    %29 = vector.shape_cast %28 : vector<2xf32> to vector<2x1xf32>
    %30 = vector.broadcast %29 : vector<2x1xf32> to vector<2x16xf32>
    %31 = arith.divf %27, %30 : vector<2x16xf32>
    %32 = vector.extract_strided_slice %11 {offsets = [0, 32], sizes = [2, 16], strides = [1, 1]} : vector<2x64xf32> to vector<2x16xf32>
    %cst_14 = arith.constant dense<0xFF800000> : vector<2xf32>
    %33 = vector.multi_reduction <maximumf>, %32, %cst_14 [1] : vector<2x16xf32> to vector<2xf32>
    %34 = vector.shape_cast %33 : vector<2xf32> to vector<2x1xf32>
    %35 = vector.broadcast %34 : vector<2x1xf32> to vector<2x16xf32>
    %36 = arith.subf %32, %35 : vector<2x16xf32>
    %37 = math.exp %36 : vector<2x16xf32>
    %cst_15 = arith.constant dense<0.000000e+00> : vector<2xf32>
    %38 = vector.multi_reduction <add>, %37, %cst_15 [1] : vector<2x16xf32> to vector<2xf32>
    %39 = vector.shape_cast %38 : vector<2xf32> to vector<2x1xf32>
    %40 = vector.broadcast %39 : vector<2x1xf32> to vector<2x16xf32>
    %41 = arith.divf %37, %40 : vector<2x16xf32>
    %42 = vector.extract_strided_slice %11 {offsets = [0, 48], sizes = [2, 16], strides = [1, 1]} : vector<2x64xf32> to vector<2x16xf32>
    %cst_16 = arith.constant dense<0xFF800000> : vector<2xf32>
    %43 = vector.multi_reduction <maximumf>, %42, %cst_16 [1] : vector<2x16xf32> to vector<2xf32>
    %44 = vector.shape_cast %43 : vector<2xf32> to vector<2x1xf32>
    %45 = vector.broadcast %44 : vector<2x1xf32> to vector<2x16xf32>
    %46 = arith.subf %42, %45 : vector<2x16xf32>
    %47 = math.exp %46 : vector<2x16xf32>
    %cst_17 = arith.constant dense<0.000000e+00> : vector<2xf32>
    %48 = vector.multi_reduction <add>, %47, %cst_17 [1] : vector<2x16xf32> to vector<2xf32>
    %49 = vector.shape_cast %48 : vector<2xf32> to vector<2x1xf32>
    %50 = vector.broadcast %49 : vector<2x1xf32> to vector<2x16xf32>
    %51 = arith.divf %47, %50 : vector<2x16xf32>
    %52 = tpu.concatenate %21, %31, %41, %51 in 1 : vector<2x16xf32>, vector<2x16xf32>, vector<2x16xf32>, vector<2x16xf32> -> vector<2x64xf32>
    %c0_18 = arith.constant 0 : index
    %c0_19 = arith.constant 0 : index
    %53 = vector.load %arg6[%c0_18, %c0_19] : memref<2x64xf32, #tpu.memory_space<vmem>>, vector<2x64xf32>
    tpu.vector_store %arg6[%c0_18, %c0_19], %52 {strides = array<i32>} : memref<2x64xf32, #tpu.memory_space<vmem>>, vector<2x64xf32>,
    return
  }
  func.func @transform_0(%arg0: i32) -> (i32, i32) {
    %c0_i32 = arith.constant 0 : i32
    %c0_i32_0 = arith.constant 0 : i32
    return %arg0, %c0_i32 : i32, i32
  }
  func.func @transform_1(%arg0: i32) -> (i32, i32) {
    %c0_i32 = arith.constant 0 : i32
    %c0_i32_0 = arith.constant 0 : i32
    %c0_i32_1 = arith.constant 0 : i32
    return %c0_i32, %c0_i32_0 : i32, i32
  }
  func.func @transform_2(%arg0: i32) -> (i32, i32) {
    %c0_i32 = arith.constant 0 : i32
    %c0_i32_0 = arith.constant 0 : i32
    %c0_i32_1 = arith.constant 0 : i32
    return %c0_i32, %c0_i32_0 : i32, i32
  }
  func.func @transform_3(%arg0: i32) -> (i32, i32) {
    %c0_i32 = arith.constant 0 : i32
    %c0_i32_0 = arith.constant 0 : i32
    %c0_i32_1 = arith.constant 0 : i32
    return %c0_i32, %c0_i32_0 : i32, i32
  }
  func.func @transform_4(%arg0: i32) -> (i32, i32) {
    %c0_i32 = arith.constant 0 : i32
    %c0_i32_0 = arith.constant 0 : i32
    %c0_i32_1 = arith.constant 0 : i32
    return %c0_i32, %c0_i32_0 : i32, i32
  }
  func.func @transform_5(%arg0: i32) -> (i32, i32) {
    %c0_i32 = arith.constant 0 : i32
    %c0_i32_0 = arith.constant 0 : i32
    return %arg0, %c0_i32 : i32, i32
  }
}

</mosaic_0001>

<llo_original>
// kernel: tpu_custom_call.1
$region0: #{tpu_custom_call.1}
  #allocation0 [shape = 'u32[]', space=smem, size = 0x4, offset = 0x4, fixed_abs, tag = 'smem constant byte address 0x4 - core index']
  #allocation1 [shape = 'u32[144,128]{1,0:T(1,128)}', space=vmem, size = 0x12000, scoped, tag = 'internal scratch']
  %s0 = inlined_call_operand.vmem [shape: f32[2,112], index: 0, kind: input, shape index: {}]
  %s1 = inlined_call_operand.vmem [shape: f32[112,8], index: 1, kind: input, shape index: {}]
  %s2 = inlined_call_operand.vmem [shape: f32[1,8], index: 2, kind: input, shape index: {}]
  %s3 = inlined_call_operand.vmem [shape: f32[8,64], index: 3, kind: input, shape index: {}]
  %s4 = inlined_call_operand.vmem [shape: f32[1,64], index: 4, kind: input, shape index: {}]
  %s5 = inlined_call_operand.hbm [shape: f32[2,64], index: 5, kind: output, shape index: {}]
  %s6 = sld [smem:[#allocation0]]
  $region30: #{tpu_custom_call.1} parent=0
    _
  %s8 = ssub.s32 1, %s6
  %s9 = scalar_select 0, %s8, %s6
  $region1: #{tpu_custom_call.1} parent=0
    #allocation2 [shape = 'u8[1024]{0}', space=vmem, size = 0x400, scoped, tag = 'output window, operand 0, single buffered']
    #allocation3 [shape = 's32[1]{0}', space=sflag, size = 0x4, scoped, tag = 'scoped memory for tpu_custom_call.1']
    %10 = vsyncpa [#allocation3], 0
    // Predicated region
    $region2: #{tpu_custom_call.1} parent=1 // pred_check
      _
    $region3: #{tpu_custom_call.1} parent=1 // pred_check_branch
      %12 = sbr.rel (0) target = $region5
    $region4: #{tpu_custom_call.1} parent=1 // pred_region
      _
    $region5: #{tpu_custom_call.1} parent=1 // pred_fallthru
      _
    // Predicated region
    $region6: #{tpu_custom_call.1} parent=1 // pred_check
      _
    $region7: #{tpu_custom_call.1} parent=1 // pred_check_branch
      %14 = sbr.rel (0) target = $region9
    $region8: #{tpu_custom_call.1} parent=1 // pred_region
      _
    $region9: #{tpu_custom_call.1} parent=1 // pred_fallthru
      _
    // Predicated region
    $region10: #{tpu_custom_call.1} parent=1 // pred_check
      _
    $region11: #{tpu_custom_call.1} parent=1 // pred_check_branch
      %16 = sbr.rel (0) target = $region13
    $region12: #{tpu_custom_call.1} parent=1 // pred_region
      _
    $region13: #{tpu_custom_call.1} parent=1 // pred_fallthru
      _
    // Predicated region
    $region14: #{tpu_custom_call.1} parent=1 // pred_check
      _
    $region15: #{tpu_custom_call.1} parent=1 // pred_check_branch
      %18 = sbr.rel (0) target = $region17
    $region16: #{tpu_custom_call.1} parent=1 // pred_region
      _
    $region17: #{tpu_custom_call.1} parent=1 // pred_fallthru
      _
    // Predicated region
    $region18: #{tpu_custom_call.1} parent=1 // pred_check
      _
    $region19: #{tpu_custom_call.1} parent=1 // pred_check_branch
      %20 = sbr.rel (0) target = $region21
    $region20: #{tpu_custom_call.1} parent=1 // pred_region
      _
    $region21: #{tpu_custom_call.1} parent=1 // pred_fallthru
      _
    %v21 = vld [vmem:[%s0] sm:$0x3]
    %v22 = vld [vmem:[%s1] sm:$0xff]
    %v23 = vld [vmem:[%s1 + $0x8] sm:$0xff]
    %v24 = vld [vmem:[%s1 + $0x10] sm:$0xff]
    %v25 = vld [vmem:[%s1 + $0x18] sm:$0xff]
    %v26 = vld [vmem:[%s1 + $0x20] sm:$0xff]
    %v27 = vld [vmem:[%s1 + $0x28] sm:$0xff]
    %v28 = vld [vmem:[%s1 + $0x30] sm:$0xff]
    %v29 = vld [vmem:[%s1 + $0x38] sm:$0xff]
    %v30 = vld [vmem:[%s1 + $0x40] sm:$0xff]
    %v31 = vld [vmem:[%s1 + $0x48] sm:$0xff]
    %v32 = vld [vmem:[%s1 + $0x50] sm:$0xff]
    %v33 = vld [vmem:[%s1 + $0x58] sm:$0xff]
    %v34 = vld [vmem:[%s1 + $0x60] sm:$0xff]
    %v35 = vld [vmem:[%s1 + $0x68] sm:$0xff]
    %v36 = vld [vmem:[%s2] sm:$0x1]
    %v38 = vlaneseq
    %v39 = vshrl.u32 %v38, 7
    %v40 = vsub.s32 0, %v39
    %v41 = vrot.slane %v36, %v40
    %vm43 = vcmask 916480
    %v45 = vsel %vm43, %v21, 0
    %47 = vmatprep.subr.mxu0 0.0
    %48 = vmatpush1.msra.mxu0 %v22
    %49 = vmatprep.subr.mxu0 0.0
    %50 = vmatpush1.msra.mxu0 %v23
    %51 = vmatprep.subr.mxu0 0.0
    %52 = vmatpush1.msra.mxu0 %v24
    %53 = vmatprep.subr.mxu0 0.0
    %54 = vmatpush1.msra.mxu0 %v25
    %55 = vmatprep.subr.mxu0 0.0
    %56 = vmatpush1.msra.mxu0 %v26
    %57 = vmatprep.subr.mxu0 0.0
    %58 = vmatpush1.msra.mxu0 %v27
    %59 = vmatprep.subr.mxu0 0.0
    %60 = vmatpush1.msra.mxu0 %v28
    %61 = vmatprep.subr.mxu0 0.0
    %62 = vmatpush1.msra.mxu0 %v29
    %63 = vmatprep.subr.mxu0 0.0
    %64 = vmatpush1.msra.mxu0 %v30
    %65 = vmatprep.subr.mxu0 0.0
    %66 = vmatpush1.msra.mxu0 %v31
    %67 = vmatprep.subr.mxu0 0.0
    %68 = vmatpush1.msra.mxu0 %v32
    %69 = vmatprep.subr.mxu0 0.0
    %70 = vmatpush1.msra.mxu0 %v33
    %71 = vmatprep.subr.mxu0 0.0
    %72 = vmatpush1.msra.mxu0 %v34
    %73 = vmatprep.subr.mxu0 0.0
    %74 = vmatpush1.msra.mxu0 %v35
    %75 = vmatprep.subr.mxu0 0.0
    %76 = vmatpush1.msra.mxu0 0.0
    %77 = vmatprep.subr.mxu0 0.0
    %78 = vmatpush1.msra.mxu0 0.0
    %79 = vmatprep.subr.mxu0 0.0
    %80 = vmatpush1.msra.mxu0 0.0
    %81 = vmatprep.subr.mxu0 0.0
    %82 = vmatpush1.msra.mxu0 0.0
    %83 = vmatprep.subr.mxu0 0.0
    %84 = vmatpush1.msra.mxu0 0.0
    %85 = vmatprep.subr.mxu0 0.0
    %86 = vmatpush1.msra.mxu0 0.0
    %87 = vmatprep.subr.mxu0 0.0
    %88 = vmatpush1.msra.mxu0 0.0
    %89 = vmatprep.subr.mxu0 0.0
    %90 = vmatpush1.msra.mxu0 0.0
    %91 = vmatprep.subr.mxu0 0.0
    %92 = vmatpush1.msra.mxu0 0.0
    %93 = vmatprep.subr.mxu0 0.0
    %94 = vmatpush1.msra.mxu0 0.0
    %95 = vmatprep.subr.mxu0 0.0
    %96 = vmatpush1.msra.mxu0 0.0
    %97 = vmatprep.subr.mxu0 0.0
    %98 = vmatpush1.msra.mxu0 0.0
    %99 = vmatprep.subr.mxu0 0.0
    %100 = vmatpush1.msra.mxu0 0.0
    %101 = vmatprep.subr.mxu0 0.0
    %102 = vmatpush1.msra.mxu0 0.0
    %103 = vmatprep.subr.mxu0 0.0
    %104 = vmatpush1.msra.mxu0 0.0
    %105 = vmatprep.subr.mxu0 0.0
    %106 = vmatpush1.msra.mxu0 0.0
    %107 = vmatprep.subr.mxu0 0.0
    %108 = vmatpush1.msra.mxu0 0.0
    %109 = vmatprep.subr.mxu0 0.0
    %110 = vmatpush1.msra.mxu0 0.0
    %111 = vmatprep.mubr.f32.mxu0 0.0
    %112 = vmatmul.mubr.f32.gmra.mrb[0].mxu0 %v45
    %v113 = vpop.f32.mrb[0].mxu0
    %v114 = vadd.f32 %v41, %v113
    %v115 = vpop.f32.mrb[0].mxu0
    %116 = vdwg.mxu0
    %v117 = vtanh.pop %v114
    %v118 = vld [vmem:[%s3] sm:$0xff]
    %v119 = vld [vmem:[%s4] sm:$0x1]
    %v121 = vlaneseq
    %v122 = vshrl.u32 %v121, 7
    %v123 = vsub.s32 0, %v122
    %v124 = vrot.slane %v119, %v123
    %vm126 = vcmask 64512
    %v128 = vsel %vm126, %v117, 0
    %130 = vmatprep.subr.mxu0 0.0
    %131 = vmatpush1.msra.mxu0 %v118
    %132 = vmatprep.subr.mxu0 0.0
    %133 = vmatpush1.msra.mxu0 0.0
    %134 = vmatprep.subr.mxu0 0.0
    %135 = vmatpush1.msra.mxu0 0.0
    %136 = vmatprep.subr.mxu0 0.0
    %137 = vmatpush1.msra.mxu0 0.0
    %138 = vmatprep.subr.mxu0 0.0
    %139 = vmatpush1.msra.mxu0 0.0
    %140 = vmatprep.subr.mxu0 0.0
    %141 = vmatpush1.msra.mxu0 0.0
    %142 = vmatprep.subr.mxu0 0.0
    %143 = vmatpush1.msra.mxu0 0.0
    %144 = vmatprep.subr.mxu0 0.0
    %145 = vmatpush1.msra.mxu0 0.0
    %146 = vmatprep.subr.mxu0 0.0
    %147 = vmatpush1.msra.mxu0 0.0
    %148 = vmatprep.subr.mxu0 0.0
    %149 = vmatpush1.msra.mxu0 0.0
    %150 = vmatprep.subr.mxu0 0.0
    %151 = vmatpush1.msra.mxu0 0.0
    %152 = vmatprep.subr.mxu0 0.0
    %153 = vmatpush1.msra.mxu0 0.0
    %154 = vmatprep.subr.mxu0 0.0
    %155 = vmatpush1.msra.mxu0 0.0
    %156 = vmatprep.subr.mxu0 0.0
    %157 = vmatpush1.msra.mxu0 0.0
    %158 = vmatprep.subr.mxu0 0.0
    %159 = vmatpush1.msra.mxu0 0.0
    %160 = vmatprep.subr.mxu0 0.0
    %161 = vmatpush1.msra.mxu0 0.0
    %162 = vmatprep.subr.mxu0 0.0
    %163 = vmatpush1.msra.mxu0 0.0
    %164 = vmatprep.subr.mxu0 0.0
    %165 = vmatpush1.msra.mxu0 0.0
    %166 = vmatprep.subr.mxu0 0.0
    %167 = vmatpush1.msra.mxu0 0.0
    %168 = vmatprep.subr.mxu0 0.0
    %169 = vmatpush1.msra.mxu0 0.0
    %170 = vmatprep.subr.mxu0 0.0
    %171 = vmatpush1.msra.mxu0 0.0
    %172 = vmatprep.subr.mxu0 0.0
    %173 = vmatpush1.msra.mxu0 0.0
    %174 = vmatprep.subr.mxu0 0.0
    %175 = vmatpush1.msra.mxu0 0.0
    %176 = vmatprep.subr.mxu0 0.0
    %177 = vmatpush1.msra.mxu0 0.0
    %178 = vmatprep.subr.mxu0 0.0
    %179 = vmatpush1.msra.mxu0 0.0
    %180 = vmatprep.subr.mxu0 0.0
    %181 = vmatpush1.msra.mxu0 0.0
    %182 = vmatprep.subr.mxu0 0.0
    %183 = vmatpush1.msra.mxu0 0.0
    %184 = vmatprep.subr.mxu0 0.0
    %185 = vmatpush1.msra.mxu0 0.0
    %186 = vmatprep.subr.mxu0 0.0
    %187 = vmatpush1.msra.mxu0 0.0
    %188 = vmatprep.subr.mxu0 0.0
    %189 = vmatpush1.msra.mxu0 0.0
    %190 = vmatprep.subr.mxu0 0.0
    %191 = vmatpush1.msra.mxu0 0.0
    %192 = vmatprep.subr.mxu0 0.0
    %193 = vmatpush1.msra.mxu0 0.0
    %194 = vmatprep.mubr.f32.mxu0 0.0
    %195 = vmatmul.mubr.f32.gmra.mrb[0].mxu0 %v128
    %v196 = vpop.f32.mrb[0].mxu0
    %v197 = vadd.f32 %v124, %v196
    %v198 = vpop.f32.mrb[0].mxu0
    %199 = vdwg.mxu0
    %vm200 = vcmask 123904
    %v201 = vsel %vm200, %v197, -inf
    %202 = vmax.xlane.f32.xlu0 %v201
    %v203 = vpop.xlane.xlu0 %202
    %v204 = vsub.f32 %v197, %v203
    %v205 = vmul.f32 %v204, 1.442695
    %v206 = vpow.pop %v205
    %v207 = vsel %vm200, %v206, 0.0
    %208 = vadd.xlane.f32.xlu0 %v207
    %v209 = vpop.xlane.xlu0 %208
    %v210 = vrcp.pop %v209
    %v211 = vmul.f32 %v206, %v210
    %vm212 = vcmask 255104
    %v213 = vsel %vm212, %v197, -inf
    %214 = vmax.xlane.f32.xlu0 %v213
    %v215 = vpop.xlane.xlu0 %214
    %v216 = vsub.f32 %v197, %v215
    %v217 = vmul.f32 %v216, 1.442695
    %v218 = vpow.pop %v217
    %220 = vrot.lane.b32.xlu0 %v218, 112
    %v221 = vpop.permute.xlu0 %220
    %v223 = vsel %vm200, %v221, 0.0
    %224 = vadd.xlane.f32.xlu0 %v223
    %v225 = vpop.xlane.xlu0 %224
    %v226 = vrcp.pop %v225
    %v227 = vmul.f32 %v218, %v226
    %vm228 = vcmask 386304
    %v229 = vsel %vm228, %v197, -inf
    %230 = vmax.xlane.f32.xlu0 %v229
    %v231 = vpop.xlane.xlu0 %230
    %v232 = vsub.f32 %v197, %v231
    %v233 = vmul.f32 %v232, 1.442695
    %v234 = vpow.pop %v233
    %236 = vrot.lane.b32.xlu0 %v234, 96
    %v237 = vpop.permute.xlu0 %236
    %v239 = vsel %vm200, %v237, 0.0
    %240 = vadd.xlane.f32.xlu0 %v239
    %v241 = vpop.xlane.xlu0 %240
    %v242 = vrcp.pop %v241
    %v243 = vmul.f32 %v234, %v242
    %vm244 = vcmask 517504
    %v245 = vsel %vm244, %v197, -inf
    %246 = vmax.xlane.f32.xlu0 %v245
    %v247 = vpop.xlane.xlu0 %246
    %v248 = vsub.f32 %v197, %v247
    %v249 = vmul.f32 %v248, 1.442695
    %v250 = vpow.pop %v249
    %252 = vrot.lane.b32.xlu0 %v250, 80
    %v253 = vpop.permute.xlu0 %252
    %v255 = vsel %vm200, %v253, 0.0
    %256 = vadd.xlane.f32.xlu0 %v255
    %v257 = vpop.xlane.xlu0 %256
    %v258 = vrcp.pop %v257
    %v259 = vmul.f32 %v250, %v258
    %vm260 = vcmask 130048
    %v261 = vsel %vm260, %v211, %v227
    %vm262 = vcmask 261120
    %v263 = vsel %vm262, %v261, %v243
    %vm264 = vcmask 392192
    %v265 = vsel %vm264, %v263, %v259
    %vm266 = vcmask 517120
    %267 = vst.msk [vmem:[#allocation2] sm:$0x3] %vm266, %v265
    // Predicated region
    $region22: #{tpu_custom_call.1} parent=1 // pred_check
      _
    $region23: #{tpu_custom_call.1} parent=1 // pred_check_branch
      %269 = sbr.rel (0) target = $region25
    $region24: #{tpu_custom_call.1} parent=1 // pred_region
      %s271 = ssub.s32 32, 32
      %272 = vsyncadd [#allocation3], %s271
      %s274 = sshll.u32 [#allocation2], 4
      %s275 = int_to_ptr.vmem [resolvable:$true] %s274
      %277 = dma.vmem_to_hbm [thread:$0]  %s275, 32, %s5, [#allocation3]
    $region25: #{tpu_custom_call.1} parent=1 // pred_fallthru
      _
    // Predicated region
    $region26: #{tpu_custom_call.1} parent=1 // pred_check
      _
    $region27: #{tpu_custom_call.1} parent=1 // pred_check_branch
      %279 = sbr.rel (0) target = $region29
    $region28: #{tpu_custom_call.1} parent=1 // pred_region
      %280 = dma.done [#allocation3], 32
    $region29: #{tpu_custom_call.1} parent=1 // pred_fallthru
      _
    %281 = vsyncpa [#allocation3], 1

</llo_original>
